<compile_context>
chip_gen: v6e
topology: v6e:2x2x1
jax: 0.10.0
libtpu: 0.0.40
codegen_flags: <defaults>
</compile_context>

<pallas_src>
import functools

import jax
import jax.numpy as jnp
from jax.experimental import pallas as pl
from jax.experimental.pallas import tpu as pltpu

EPS = 1e-5  # torch GroupNorm default eps


def _round_up(x, m):
    return ((x + m - 1) // m) * m


def _group_norm_1g(v, gamma, beta):
    """GroupNorm(num_groups=1) applied row-wise over the last axis of (TB, N)."""
    m = jnp.mean(v, axis=-1, keepdims=True)
    var = jnp.mean((v - m) ** 2, axis=-1, keepdims=True)  # biased, like torch
    return (v - m) * jax.lax.rsqrt(var + EPS) * gamma + beta


def skip_pool_kernel(x_ref,
                     g1_ref, be1_ref,          # GroupNorm(1, C)
                     w1_ref, b1_ref,           # Conv1x1 C -> mid (W1 as (C, mid))
                     g2_ref, be2_ref,          # GroupNorm(1, mid)
                     w2_ref, b2_ref,           # Conv1x1 mid -> out (W2 as (mid, out))
                     g3_ref, be3_ref,          # GroupNorm(1, out)
                     o_ref,
                     acc_ref,                  # VMEM (TB, C) partial-sum accumulator
                     *, hw_true):
    hw_id = pl.program_id(1)

    @pl.when(hw_id == 0)
    def _():
        acc_ref[...] = jnp.zeros_like(acc_ref)

    # Partial spatial sum for this (TB, C, tHW) tile.  Spatial padding is
    # zero-filled, so it does not contribute.
    acc_ref[...] += jnp.sum(x_ref[...], axis=-1)            # (TB, C)

    @pl.when(hw_id == pl.num_programs(1) - 1)
    def _():
        # AdaptiveAvgPool2d(1): divide by the TRUE spatial size.
        pooled = acc_ref[...] * (1.0 / hw_true)              # (TB, C)

        # fc[0]: GroupNorm(1, C)
        h = _group_norm_1g(pooled, g1_ref[...], be1_ref[...])            # (TB, C)
        # fc[1]: Conv2d(C, mid, 1) on a 1x1 map == linear
        h = jnp.dot(h, w1_ref[...],
                    preferred_element_type=jnp.float32) + b1_ref[...]    # (TB, mid)
        # fc[2], fc[3]: GroupNorm(1, mid) then ReLU
        h = jnp.maximum(_group_norm_1g(h, g2_ref[...], be2_ref[...]), 0.0)
        # fc[4]: Conv2d(mid, out, 1)
        h = jnp.dot(h, w2_ref[...],
                    preferred_element_type=jnp.float32) + b2_ref[...]    # (TB, out)
        # fc[5], fc[6]: GroupNorm(1, out) then ReLU
        h = jnp.maximum(_group_norm_1g(h, g3_ref[...], be3_ref[...]), 0.0)

        o_ref[...] = h


def _choose_tiles(B, C, HW, x_block_budget_bytes=4 << 20, max_thw=2048):
    """Pick (TB, B_pad, tHW, HW_pad) respecting (8,128) tiling + VMEM budget."""
    # Spatial tile: full HW if small, else 2048-lane tiles (multiple of 128).
    if HW <= max_thw:
        tHW, HW_pad = HW, HW
    else:
        tHW = max_thw
        HW_pad = _round_up(HW, tHW)

    # Batch tile: multiple of 8 (sublane-aligned out block), budget-capped.
    per_elem_bytes = C * tHW * 4
    tb = max(1, x_block_budget_bytes // per_elem_bytes)
    tb = max(8, (tb // 8) * 8)
    tb = min(tb, 64)

    b8 = _round_up(B, 8)
    tb = min(tb, b8)
    # Keep >=2 batch grid steps when there is enough work (v7x: feed both TCs).
    if b8 >= 16 and b8 // tb < 2:
        tb = max(8, ((b8 // 2) // 8) * 8)

    B_pad = _round_up(B, tb)
    return tb, B_pad, tHW, HW_pad


def skip_pool_forward(x_nchw, params):
    """x_nchw: (B, C, H, W) float32. Returns (B, out_channels) float32."""
    B, C, H, W = x_nchw.shape
    HW = H * W
    (g1, be1, w1_t, b1, g2, be2, w2_t, b2, g3, be3) = params
    mid = w1_t.shape[1]
    out_ch = w2_t.shape[1]

    TB, B_pad, tHW, HW_pad = _choose_tiles(B, C, HW)

    x = x_nchw.reshape(B, C, HW)
    if B_pad != B or HW_pad != HW:
        # Zero padding: padded spatial elems add nothing to the sum; padded
        # batch rows are sliced off below.
        x = jnp.pad(x, ((0, B_pad - B), (0, 0), (0, HW_pad - HW)))

    grid = (B_pad // TB, HW_pad // tHW)

    def const(shape):
        return pl.BlockSpec(shape, lambda b, h: tuple(0 for _ in shape))

    cost = pl.CostEstimate(
        flops=int(B_pad * C * HW_pad                      # spatial reduction
                  + 2 * B_pad * (C * mid + mid * out_ch)  # the two matmuls
                  + 10 * B_pad * (C + mid + out_ch)),     # GN/ReLU elementwise
        transcendentals=0,
        bytes_accessed=int(4 * (B_pad * C * HW_pad + B_pad * out_ch
                                + C * mid + mid * out_ch
                                + 2 * (C + 2 * mid + 2 * out_ch))),
    )

    kernel = functools.partial(skip_pool_kernel, hw_true=float(HW))

    out = pl.pallas_call(
        kernel,
        out_shape=jax.ShapeDtypeStruct((B_pad, out_ch), jnp.float32),
        grid_spec=pltpu.PrefetchScalarGridSpec(
            num_scalar_prefetch=0,
            grid=grid,
            in_specs=[
                pl.BlockSpec((TB, C, tHW), lambda b, h: (b, 0, h)),  # x
                const((1, C)), const((1, C)),                        # gn1 gamma/beta
                const((C, mid)), const((1, mid)),                    # W1^T, b1
                const((1, mid)), const((1, mid)),                    # gn2 gamma/beta
                const((mid, out_ch)), const((1, out_ch)),            # W2^T, b2
                const((1, out_ch)), const((1, out_ch)),              # gn3 gamma/beta
            ],
            # Same output block across the HW axis -> resident accumulator tile.
            out_specs=pl.BlockSpec((TB, out_ch), lambda b, h: (b, 0)),
            scratch_shapes=[pltpu.VMEM((TB, C), jnp.float32)],
        ),
        compiler_params=pltpu.CompilerParams(
            dimension_semantics=("parallel", "arbitrary")),
        cost_estimate=cost,
    )(x, g1, be1, w1_t, b1, g2, be2, w2_t, b2, g3, be3)

    return out[:B]


def make_params(key, channels, reduction, out_channels):
    """Deterministic synthetic parameters (shapes from SkipPool.__init__)."""
    mid = max(channels // reduction, 64)
    ks = jax.random.split(key, 8)
    g1 = 1.0 + 0.1 * jax.random.normal(ks[0], (1, channels), jnp.float32)
    be1 = 0.1 * jax.random.normal(ks[1], (1, channels), jnp.float32)
    g2 = 1.0 + 0.1 * jax.random.normal(ks[2], (1, mid), jnp.float32)
    be2 = 0.1 * jax.random.normal(ks[3], (1, mid), jnp.float32)
    g3 = 1.0 + 0.1 * jax.random.normal(ks[4], (1, out_channels), jnp.float32)
    be3 = 0.1 * jax.random.normal(ks[5], (1, out_channels), jnp.float32)
    # Conv 1x1 weights, stored transposed as (in, out) so the kernel does h @ W^T.
    w1_t = jax.random.normal(ks[6], (channels, mid), jnp.float32) / jnp.sqrt(channels)
    b1 = 0.05 * jnp.sin(jnp.arange(mid, dtype=jnp.float32))[None, :]
    w2_t = jax.random.normal(ks[7], (mid, out_channels), jnp.float32) / jnp.sqrt(mid)
    b2 = 0.05 * jnp.cos(jnp.arange(out_channels, dtype=jnp.float32))[None, :]
    return (g1, be1, w1_t, b1, g2, be2, w2_t, b2, g3, be3)


def skip_pool_reference(x_nchw, params):
    """Pure-JAX reference (mirrors the PyTorch forward in eval mode)."""
    (g1, be1, w1_t, b1, g2, be2, w2_t, b2, g3, be3) = params

    def gn(v, gamma, beta):
        m = jnp.mean(v, axis=-1, keepdims=True)
        var = jnp.mean((v - m) ** 2, axis=-1, keepdims=True)
        return (v - m) / jnp.sqrt(var + EPS) * gamma + beta

    pooled = jnp.mean(x_nchw, axis=(2, 3))           # (B, C)
    h = gn(pooled, g1, be1)
    h = h @ w1_t + b1
    h = jnp.maximum(gn(h, g2, be2), 0.0)
    h = h @ w2_t + b2
    h = jnp.maximum(gn(h, g3, be3), 0.0)
    return h


if __name__ == "__main__":
    reduction, out_channels = 4, 32     # mid = max(C // reduction, 64) = 64
    key = jax.random.PRNGKey(0)

    # Case 1: small map, single spatial step (HW <= tHW).
    # Case 2: larger map, exercises the HW-reduction grid axis + spatial padding.
    for (B, C, H, W) in [(2, 16, 16, 16), (2, 16, 48, 48)]:
        kx, kp, key = jax.random.split(key, 3)
        x = jax.random.normal(kx, (B, C, H, W), jnp.float32)
        params = make_params(kp, C, reduction, out_channels)

        out = skip_pool_forward(x, params)
        out = jax.block_until_ready(out)

        ref = skip_pool_reference(x, params)
        assert out.shape == (B, out_channels), out.shape
        assert jnp.allclose(out, ref, atol=1e-4, rtol=1e-4), (
            f"shape {(B, C, H, W)}: max abs err {jnp.max(jnp.abs(out - ref))}")

    print("KERNEL_OK")
</pallas_src>

<mosaic_0001>
module attributes {stable_mosaic.version = 11 : i64} {
  func.func @skip_pool_kernel(%arg0: i32, %arg1: i32, %arg2: memref<8x16x256xf32, #tpu.memory_space<vmem>>, %arg3: memref<1x16xf32, #tpu.memory_space<vmem>>, %arg4: memref<1x16xf32, #tpu.memory_space<vmem>>, %arg5: memref<16x64xf32, #tpu.memory_space<vmem>>, %arg6: memref<1x64xf32, #tpu.memory_space<vmem>>, %arg7: memref<1x64xf32, #tpu.memory_space<vmem>>, %arg8: memref<1x64xf32, #tpu.memory_space<vmem>>, %arg9: memref<64x32xf32, #tpu.memory_space<vmem>>, %arg10: memref<1x32xf32, #tpu.memory_space<vmem>>, %arg11: memref<1x32xf32, #tpu.memory_space<vmem>>, %arg12: memref<1x32xf32, #tpu.memory_space<vmem>>, %arg13: memref<8x32xf32, #tpu.memory_space<vmem>>, %arg14: memref<8x16xf32, #tpu.memory_space<vmem>>) attributes {dimension_semantics = [#tpu.dimension_semantics<parallel>, #tpu.dimension_semantics<arbitrary>], iteration_bounds = array<i64: 1, 1>, scalar_prefetch = 0 : i64, scratch_operands = 1 : i64, tpu.core_type = #tpu.core_type<tc>, window_params = [{transform_indices = @transform_0, window_bounds = array<i64: 8, 16, 256>}, {pipeline_mode = #tpu.pipeline_mode<synchronous>, transform_indices = @transform_1, window_bounds = array<i64: 1, 16>}, {pipeline_mode = #tpu.pipeline_mode<synchronous>, transform_indices = @transform_2, window_bounds = array<i64: 1, 16>}, {pipeline_mode = #tpu.pipeline_mode<synchronous>, transform_indices = @transform_3, window_bounds = array<i64: 16, 64>}, {pipeline_mode = #tpu.pipeline_mode<synchronous>, transform_indices = @transform_4, window_bounds = array<i64: 1, 64>}, {pipeline_mode = #tpu.pipeline_mode<synchronous>, transform_indices = @transform_5, window_bounds = array<i64: 1, 64>}, {pipeline_mode = #tpu.pipeline_mode<synchronous>, transform_indices = @transform_6, window_bounds = array<i64: 1, 64>}, {pipeline_mode = #tpu.pipeline_mode<synchronous>, transform_indices = @transform_7, window_bounds = array<i64: 64, 32>}, {pipeline_mode = #tpu.pipeline_mode<synchronous>, transform_indices = @transform_8, window_bounds = array<i64: 1, 32>}, {pipeline_mode = #tpu.pipeline_mode<synchronous>, transform_indices = @transform_9, window_bounds = array<i64: 1, 32>}, {pipeline_mode = #tpu.pipeline_mode<synchronous>, transform_indices = @transform_10, window_bounds = array<i64: 1, 32>}, {transform_indices = @transform_11, window_bounds = array<i64: 8, 32>}]} {
    %c0_i32 = arith.constant 0 : i32
    %0 = arith.cmpi eq, %arg1, %c0_i32 : i32
    %1 = arith.extui %0 : i1 to i32
    %c0_i32_0 = arith.constant 0 : i32
    %2 = arith.cmpi ne, %1, %c0_i32_0 : i32
    scf.if %2 {
      %cst_9 = arith.constant 0.000000e+00 : f32
      %11 = vector.broadcast %cst_9 : f32 to vector<8x16xf32>
      %c0_10 = arith.constant 0 : index
      %c0_11 = arith.constant 0 : index
      %12 = vector.load %arg14[%c0_10, %c0_11] : memref<8x16xf32, #tpu.memory_space<vmem>>, vector<8x16xf32>
      tpu.vector_store %arg14[%c0_10, %c0_11], %11 {strides = array<i32>} : memref<8x16xf32, #tpu.memory_space<vmem>>, vector<8x16xf32>,
    } else {
    }
    %c0 = arith.constant 0 : index
    %c0_1 = arith.constant 0 : index
    %3 = vector.load %arg14[%c0, %c0_1] : memref<8x16xf32, #tpu.memory_space<vmem>>, vector<8x16xf32>
    %c0_2 = arith.constant 0 : index
    %c0_3 = arith.constant 0 : index
    %c0_4 = arith.constant 0 : index
    %4 = vector.load %arg2[%c0_2, %c0_3, %c0_4] : memref<8x16x256xf32, #tpu.memory_space<vmem>>, vector<8x16x256xf32>
    %cst = arith.constant dense<0.000000e+00> : vector<8x16xf32>
    %5 = vector.multi_reduction <add>, %4, %cst [2] : vector<8x16x256xf32> to vector<8x16xf32>
    %6 = arith.addf %3, %5 : vector<8x16xf32>
    %c0_5 = arith.constant 0 : index
    %c0_6 = arith.constant 0 : index
    %7 = vector.load %arg14[%c0_5, %c0_6] : memref<8x16xf32, #tpu.memory_space<vmem>>, vector<8x16xf32>
    tpu.vector_store %arg14[%c0_5, %c0_6], %6 {strides = array<i32>} : memref<8x16xf32, #tpu.memory_space<vmem>>, vector<8x16xf32>,
    %c0_i32_7 = arith.constant 0 : i32
    %8 = arith.cmpi eq, %arg1, %c0_i32_7 : i32
    %9 = arith.extui %8 : i1 to i32
    %c0_i32_8 = arith.constant 0 : i32
    %10 = arith.cmpi ne, %9, %c0_i32_8 : i32
    scf.if %10 {
      %c0_9 = arith.constant 0 : index
      %c0_10 = arith.constant 0 : index
      %11 = vector.load %arg14[%c0_9, %c0_10] : memref<8x16xf32, #tpu.memory_space<vmem>>, vector<8x16xf32>
      %cst_11 = arith.constant 3.906250e-03 : f32
      %12 = vector.broadcast %cst_11 : f32 to vector<8x16xf32>
      %13 = arith.mulf %11, %12 : vector<8x16xf32>
      %c0_12 = arith.constant 0 : index
      %c0_13 = arith.constant 0 : index
      %14 = vector.load %arg3[%c0_12, %c0_13] : memref<1x16xf32, #tpu.memory_space<vmem>>, vector<1x16xf32>
      %c0_14 = arith.constant 0 : index
      %c0_15 = arith.constant 0 : index
      %15 = vector.load %arg4[%c0_14, %c0_15] : memref<1x16xf32, #tpu.memory_space<vmem>>, vector<1x16xf32>
      %cst_16 = arith.constant dense<0.000000e+00> : vector<8xf32>
      %16 = vector.multi_reduction <add>, %13, %cst_16 [1] : vector<8x16xf32> to vector<8xf32>
      %17 = vector.shape_cast %16 : vector<8xf32> to vector<8x1xf32>
      %cst_17 = arith.constant 1.600000e+01 : f32
      %18 = vector.broadcast %cst_17 : f32 to vector<8x1xf32>
      %19 = arith.divf %17, %18 : vector<8x1xf32>
      %20 = vector.broadcast %19 : vector<8x1xf32> to vector<8x16xf32>
      %21 = arith.subf %13, %20 : vector<8x16xf32>
      %22 = arith.mulf %21, %21 : vector<8x16xf32>
      %cst_18 = arith.constant dense<0.000000e+00> : vector<8xf32>
      %23 = vector.multi_reduction <add>, %22, %cst_18 [1] : vector<8x16xf32> to vector<8xf32>
      %24 = vector.shape_cast %23 : vector<8xf32> to vector<8x1xf32>
      %cst_19 = arith.constant 1.600000e+01 : f32
      %25 = vector.broadcast %cst_19 : f32 to vector<8x1xf32>
      %26 = arith.divf %24, %25 : vector<8x1xf32>
      %27 = vector.broadcast %19 : vector<8x1xf32> to vector<8x16xf32>
      %28 = arith.subf %13, %27 : vector<8x16xf32>
      %cst_20 = arith.constant 9.99999974E-6 : f32
      %29 = vector.broadcast %cst_20 : f32 to vector<8x1xf32>
      %30 = arith.addf %26, %29 : vector<8x1xf32>
      %31 = math.rsqrt %30 : vector<8x1xf32>
      %32 = vector.broadcast %31 : vector<8x1xf32> to vector<8x16xf32>
      %33 = arith.mulf %28, %32 : vector<8x16xf32>
      %34 = vector.broadcast %14 : vector<1x16xf32> to vector<8x16xf32>
      %35 = arith.mulf %33, %34 : vector<8x16xf32>
      %36 = vector.broadcast %15 : vector<1x16xf32> to vector<8x16xf32>
      %37 = arith.addf %35, %36 : vector<8x16xf32>
      %c0_21 = arith.constant 0 : index
      %c0_22 = arith.constant 0 : index
      %38 = vector.load %arg5[%c0_21, %c0_22] : memref<16x64xf32, #tpu.memory_space<vmem>>, vector<16x64xf32>
      %cst_23 = arith.constant dense<0.000000e+00> : vector<8x64xf32>
      %39 = tpu.matmul %37, %38, %cst_23 {dimension_numbers = #tpu.dot_dimension_numbers<[1], [0], [0], [1], [0, 0, 1, 1], [], []>} : vector<8x16xf32>, vector<16x64xf32>, vector<8x64xf32> -> vector<8x64xf32>
      %c0_24 = arith.constant 0 : index
      %c0_25 = arith.constant 0 : index
      %40 = vector.load %arg6[%c0_24, %c0_25] : memref<1x64xf32, #tpu.memory_space<vmem>>, vector<1x64xf32>
      %41 = vector.broadcast %40 : vector<1x64xf32> to vector<8x64xf32>
      %42 = arith.addf %39, %41 : vector<8x64xf32>
      %c0_26 = arith.constant 0 : index
      %c0_27 = arith.constant 0 : index
      %43 = vector.load %arg7[%c0_26, %c0_27] : memref<1x64xf32, #tpu.memory_space<vmem>>, vector<1x64xf32>
      %c0_28 = arith.constant 0 : index
      %c0_29 = arith.constant 0 : index
      %44 = vector.load %arg8[%c0_28, %c0_29] : memref<1x64xf32, #tpu.memory_space<vmem>>, vector<1x64xf32>
      %cst_30 = arith.constant dense<0.000000e+00> : vector<8xf32>
      %45 = vector.multi_reduction <add>, %42, %cst_30 [1] : vector<8x64xf32> to vector<8xf32>
      %46 = vector.shape_cast %45 : vector<8xf32> to vector<8x1xf32>
      %cst_31 = arith.constant 6.400000e+01 : f32
      %47 = vector.broadcast %cst_31 : f32 to vector<8x1xf32>
      %48 = arith.divf %46, %47 : vector<8x1xf32>
      %49 = vector.broadcast %48 : vector<8x1xf32> to vector<8x64xf32>
      %50 = arith.subf %42, %49 : vector<8x64xf32>
      %51 = arith.mulf %50, %50 : vector<8x64xf32>
      %cst_32 = arith.constant dense<0.000000e+00> : vector<8xf32>
      %52 = vector.multi_reduction <add>, %51, %cst_32 [1] : vector<8x64xf32> to vector<8xf32>
      %53 = vector.shape_cast %52 : vector<8xf32> to vector<8x1xf32>
      %cst_33 = arith.constant 6.400000e+01 : f32
      %54 = vector.broadcast %cst_33 : f32 to vector<8x1xf32>
      %55 = arith.divf %53, %54 : vector<8x1xf32>
      %56 = vector.broadcast %48 : vector<8x1xf32> to vector<8x64xf32>
      %57 = arith.subf %42, %56 : vector<8x64xf32>
      %cst_34 = arith.constant 9.99999974E-6 : f32
      %58 = vector.broadcast %cst_34 : f32 to vector<8x1xf32>
      %59 = arith.addf %55, %58 : vector<8x1xf32>
      %60 = math.rsqrt %59 : vector<8x1xf32>
      %61 = vector.broadcast %60 : vector<8x1xf32> to vector<8x64xf32>
      %62 = arith.mulf %57, %61 : vector<8x64xf32>
      %63 = vector.broadcast %43 : vector<1x64xf32> to vector<8x64xf32>
      %64 = arith.mulf %62, %63 : vector<8x64xf32>
      %65 = vector.broadcast %44 : vector<1x64xf32> to vector<8x64xf32>
      %66 = arith.addf %64, %65 : vector<8x64xf32>
      %cst_35 = arith.constant 0.000000e+00 : f32
      %67 = vector.broadcast %cst_35 : f32 to vector<8x64xf32>
      %68 = arith.maximumf %66, %67 : vector<8x64xf32>
      %c0_36 = arith.constant 0 : index
      %c0_37 = arith.constant 0 : index
      %69 = vector.load %arg9[%c0_36, %c0_37] : memref<64x32xf32, #tpu.memory_space<vmem>>, vector<64x32xf32>
      %cst_38 = arith.constant dense<0.000000e+00> : vector<8x32xf32>
      %70 = tpu.matmul %68, %69, %cst_38 {dimension_numbers = #tpu.dot_dimension_numbers<[1], [0], [0], [1], [0, 0, 1, 1], [], []>} : vector<8x64xf32>, vector<64x32xf32>, vector<8x32xf32> -> vector<8x32xf32>
      %c0_39 = arith.constant 0 : index
      %c0_40 = arith.constant 0 : index
      %71 = vector.load %arg10[%c0_39, %c0_40] : memref<1x32xf32, #tpu.memory_space<vmem>>, vector<1x32xf32>
      %72 = vector.broadcast %71 : vector<1x32xf32> to vector<8x32xf32>
      %73 = arith.addf %70, %72 : vector<8x32xf32>
      %c0_41 = arith.constant 0 : index
      %c0_42 = arith.constant 0 : index
      %74 = vector.load %arg11[%c0_41, %c0_42] : memref<1x32xf32, #tpu.memory_space<vmem>>, vector<1x32xf32>
      %c0_43 = arith.constant 0 : index
      %c0_44 = arith.constant 0 : index
      %75 = vector.load %arg12[%c0_43, %c0_44] : memref<1x32xf32, #tpu.memory_space<vmem>>, vector<1x32xf32>
      %cst_45 = arith.constant dense<0.000000e+00> : vector<8xf32>
      %76 = vector.multi_reduction <add>, %73, %cst_45 [1] : vector<8x32xf32> to vector<8xf32>
      %77 = vector.shape_cast %76 : vector<8xf32> to vector<8x1xf32>
      %cst_46 = arith.constant 3.200000e+01 : f32
      %78 = vector.broadcast %cst_46 : f32 to vector<8x1xf32>
      %79 = arith.divf %77, %78 : vector<8x1xf32>
      %80 = vector.broadcast %79 : vector<8x1xf32> to vector<8x32xf32>
      %81 = arith.subf %73, %80 : vector<8x32xf32>
      %82 = arith.mulf %81, %81 : vector<8x32xf32>
      %cst_47 = arith.constant dense<0.000000e+00> : vector<8xf32>
      %83 = vector.multi_reduction <add>, %82, %cst_47 [1] : vector<8x32xf32> to vector<8xf32>
      %84 = vector.shape_cast %83 : vector<8xf32> to vector<8x1xf32>
      %cst_48 = arith.constant 3.200000e+01 : f32
      %85 = vector.broadcast %cst_48 : f32 to vector<8x1xf32>
      %86 = arith.divf %84, %85 : vector<8x1xf32>
      %87 = vector.broadcast %79 : vector<8x1xf32> to vector<8x32xf32>
      %88 = arith.subf %73, %87 : vector<8x32xf32>
      %cst_49 = arith.constant 9.99999974E-6 : f32
      %89 = vector.broadcast %cst_49 : f32 to vector<8x1xf32>
      %90 = arith.addf %86, %89 : vector<8x1xf32>
      %91 = math.rsqrt %90 : vector<8x1xf32>
      %92 = vector.broadcast %91 : vector<8x1xf32> to vector<8x32xf32>
      %93 = arith.mulf %88, %92 : vector<8x32xf32>
      %94 = vector.broadcast %74 : vector<1x32xf32> to vector<8x32xf32>
      %95 = arith.mulf %93, %94 : vector<8x32xf32>
      %96 = vector.broadcast %75 : vector<1x32xf32> to vector<8x32xf32>
      %97 = arith.addf %95, %96 : vector<8x32xf32>
      %cst_50 = arith.constant 0.000000e+00 : f32
      %98 = vector.broadcast %cst_50 : f32 to vector<8x32xf32>
      %99 = arith.maximumf %97, %98 : vector<8x32xf32>
      %c0_51 = arith.constant 0 : index
      %c0_52 = arith.constant 0 : index
      %100 = vector.load %arg13[%c0_51, %c0_52] : memref<8x32xf32, #tpu.memory_space<vmem>>, vector<8x32xf32>
      tpu.vector_store %arg13[%c0_51, %c0_52], %99 {strides = array<i32>} : memref<8x32xf32, #tpu.memory_space<vmem>>, vector<8x32xf32>,
    } else {
    }
    return
  }
  func.func @transform_0(%arg0: i32, %arg1: i32) -> (i32, i32, i32) {
    %c0_i32 = arith.constant 0 : i32
    %c0_i32_0 = arith.constant 0 : i32
    return %arg0, %c0_i32, %arg1 : i32, i32, i32
  }
  func.func @transform_1(%arg0: i32, %arg1: i32) -> (i32, i32) {
    %c0_i32 = arith.constant 0 : i32
    %c0_i32_0 = arith.constant 0 : i32
    %c0_i32_1 = arith.constant 0 : i32
    return %c0_i32, %c0_i32_0 : i32, i32
  }
  func.func @transform_2(%arg0: i32, %arg1: i32) -> (i32, i32) {
    %c0_i32 = arith.constant 0 : i32
    %c0_i32_0 = arith.constant 0 : i32
    %c0_i32_1 = arith.constant 0 : i32
    return %c0_i32, %c0_i32_0 : i32, i32
  }
  func.func @transform_3(%arg0: i32, %arg1: i32) -> (i32, i32) {
    %c0_i32 = arith.constant 0 : i32
    %c0_i32_0 = arith.constant 0 : i32
    %c0_i32_1 = arith.constant 0 : i32
    return %c0_i32, %c0_i32_0 : i32, i32
  }
  func.func @transform_4(%arg0: i32, %arg1: i32) -> (i32, i32) {
    %c0_i32 = arith.constant 0 : i32
    %c0_i32_0 = arith.constant 0 : i32
    %c0_i32_1 = arith.constant 0 : i32
    return %c0_i32, %c0_i32_0 : i32, i32
  }
  func.func @transform_5(%arg0: i32, %arg1: i32) -> (i32, i32) {
    %c0_i32 = arith.constant 0 : i32
    %c0_i32_0 = arith.constant 0 : i32
    %c0_i32_1 = arith.constant 0 : i32
    return %c0_i32, %c0_i32_0 : i32, i32
  }
  func.func @transform_6(%arg0: i32, %arg1: i32) -> (i32, i32) {
    %c0_i32 = arith.constant 0 : i32
    %c0_i32_0 = arith.constant 0 : i32
    %c0_i32_1 = arith.constant 0 : i32
    return %c0_i32, %c0_i32_0 : i32, i32
  }
  func.func @transform_7(%arg0: i32, %arg1: i32) -> (i32, i32) {
    %c0_i32 = arith.constant 0 : i32
    %c0_i32_0 = arith.constant 0 : i32
    %c0_i32_1 = arith.constant 0 : i32
    return %c0_i32, %c0_i32_0 : i32, i32
  }
  func.func @transform_8(%arg0: i32, %arg1: i32) -> (i32, i32) {
    %c0_i32 = arith.constant 0 : i32
    %c0_i32_0 = arith.constant 0 : i32
    %c0_i32_1 = arith.constant 0 : i32
    return %c0_i32, %c0_i32_0 : i32, i32
  }
  func.func @transform_9(%arg0: i32, %arg1: i32) -> (i32, i32) {
    %c0_i32 = arith.constant 0 : i32
    %c0_i32_0 = arith.constant 0 : i32
    %c0_i32_1 = arith.constant 0 : i32
    return %c0_i32, %c0_i32_0 : i32, i32
  }
  func.func @transform_10(%arg0: i32, %arg1: i32) -> (i32, i32) {
    %c0_i32 = arith.constant 0 : i32
    %c0_i32_0 = arith.constant 0 : i32
    %c0_i32_1 = arith.constant 0 : i32
    return %c0_i32, %c0_i32_0 : i32, i32
  }
  func.func @transform_11(%arg0: i32, %arg1: i32) -> (i32, i32) {
    %c0_i32 = arith.constant 0 : i32
    %c0_i32_0 = arith.constant 0 : i32
    return %arg0, %c0_i32 : i32, i32
  }
}

</mosaic_0001>

<llo_original>
// kernel: tpu_custom_call.1
$region0: #{tpu_custom_call.1}
  #allocation0 [shape = 'u32[]', space=smem, size = 0x4, offset = 0x4, fixed_abs, tag = 'smem constant byte address 0x4 - core index']
  #allocation1 [shape = 'u32[144,128]{1,0:T(1,128)}', space=vmem, size = 0x12000, scoped, tag = 'internal scratch']
  #allocation2 [shape = 'f32[8,16]{1,0:T(8,128)}', space=vmem, size = 0x1000, scoped, tag = 'scratch operand']
  %s0 = inlined_call_operand.hbm [shape: f32[8,16,256], index: 0, kind: input, shape index: {}]
  %s1 = inlined_call_operand.vmem [shape: f32[1,16], index: 1, kind: input, shape index: {}]
  %s2 = inlined_call_operand.vmem [shape: f32[1,16], index: 2, kind: input, shape index: {}]
  %s3 = inlined_call_operand.vmem [shape: f32[16,64], index: 3, kind: input, shape index: {}]
  %s4 = inlined_call_operand.vmem [shape: f32[1,64], index: 4, kind: input, shape index: {}]
  %s5 = inlined_call_operand.vmem [shape: f32[1,64], index: 5, kind: input, shape index: {}]
  %s6 = inlined_call_operand.vmem [shape: f32[1,64], index: 6, kind: input, shape index: {}]
  %s7 = inlined_call_operand.vmem [shape: f32[64,32], index: 7, kind: input, shape index: {}]
  %s8 = inlined_call_operand.vmem [shape: f32[1,32], index: 8, kind: input, shape index: {}]
  %s9 = inlined_call_operand.vmem [shape: f32[1,32], index: 9, kind: input, shape index: {}]
  %s10 = inlined_call_operand.vmem [shape: f32[1,32], index: 10, kind: input, shape index: {}]
  %s11 = inlined_call_operand.hbm [shape: f32[8,32], index: 11, kind: output, shape index: {}]
  %s12 = sld [smem:[#allocation0]]
  $region66: #{tpu_custom_call.1} parent=0
    _
  %s14 = ssub.s32 1, %s12
  %s15 = scalar_select 0, %s14, %s12
  $region1: #{tpu_custom_call.1} parent=0
    #allocation3 [shape = 'u8[131072]{0}', space=vmem, size = 0x20000, scoped, tag = 'input window, operand 0, single buffered']
    #allocation4 [shape = 's32[1]{0}', space=sflag, size = 0x4, scoped, tag = 'scoped memory for tpu_custom_call.1']
    #allocation5 [shape = 's32[1]{0}', space=sflag, size = 0x4, scoped, tag = 'scoped memory for tpu_custom_call.1']
    #allocation6 [shape = 'u8[4096]{0}', space=vmem, size = 0x1000, scoped, tag = 'output window, operand 0, single buffered']
    %16 = vsyncpa [#allocation4], 0
    %17 = vsyncpa [#allocation5], 0
    // Predicated region
    $region2: #{tpu_custom_call.1} parent=1 // pred_check
      _
    $region3: #{tpu_custom_call.1} parent=1 // pred_check_branch
      %19 = sbr.rel (0) target = $region5
    $region4: #{tpu_custom_call.1} parent=1 // pred_region
      %s21 = ssub.s32 4096, 4096
      %22 = vsyncadd [#allocation4], %s21
      %s23 = sshll.u32 [#allocation3], 4
      %s24 = int_to_ptr.vmem [resolvable:$true] %s23
      %29 = dma.hbm_to_vmem [thread:$0]  %s0, 4096, %s24, [#allocation4], 256, 256, 16
    $region5: #{tpu_custom_call.1} parent=1 // pred_fallthru
      _
    // Predicated region
    $region6: #{tpu_custom_call.1} parent=1 // pred_check
      _
    $region7: #{tpu_custom_call.1} parent=1 // pred_check_branch
      %31 = sbr.rel (0) target = $region9
    $region8: #{tpu_custom_call.1} parent=1 // pred_region
      _
    $region9: #{tpu_custom_call.1} parent=1 // pred_fallthru
      _
    // Predicated region
    $region10: #{tpu_custom_call.1} parent=1 // pred_check
      _
    $region11: #{tpu_custom_call.1} parent=1 // pred_check_branch
      %33 = sbr.rel (0) target = $region13
    $region12: #{tpu_custom_call.1} parent=1 // pred_region
      _
    $region13: #{tpu_custom_call.1} parent=1 // pred_fallthru
      _
    // Predicated region
    $region14: #{tpu_custom_call.1} parent=1 // pred_check
      _
    $region15: #{tpu_custom_call.1} parent=1 // pred_check_branch
      %35 = sbr.rel (0) target = $region17
    $region16: #{tpu_custom_call.1} parent=1 // pred_region
      _
    $region17: #{tpu_custom_call.1} parent=1 // pred_fallthru
      _
    // Predicated region
    $region18: #{tpu_custom_call.1} parent=1 // pred_check
      _
    $region19: #{tpu_custom_call.1} parent=1 // pred_check_branch
      %37 = sbr.rel (0) target = $region21
    $region20: #{tpu_custom_call.1} parent=1 // pred_region
      _
    $region21: #{tpu_custom_call.1} parent=1 // pred_fallthru
      _
    // Predicated region
    $region22: #{tpu_custom_call.1} parent=1 // pred_check
      _
    $region23: #{tpu_custom_call.1} parent=1 // pred_check_branch
      %39 = sbr.rel (0) target = $region25
    $region24: #{tpu_custom_call.1} parent=1 // pred_region
      _
    $region25: #{tpu_custom_call.1} parent=1 // pred_fallthru
      _
    // Predicated region
    $region26: #{tpu_custom_call.1} parent=1 // pred_check
      _
    $region27: #{tpu_custom_call.1} parent=1 // pred_check_branch
      %41 = sbr.rel (0) target = $region29
    $region28: #{tpu_custom_call.1} parent=1 // pred_region
      _
    $region29: #{tpu_custom_call.1} parent=1 // pred_fallthru
      _
    // Predicated region
    $region30: #{tpu_custom_call.1} parent=1 // pred_check
      _
    $region31: #{tpu_custom_call.1} parent=1 // pred_check_branch
      %43 = sbr.rel (0) target = $region33
    $region32: #{tpu_custom_call.1} parent=1 // pred_region
      _
    $region33: #{tpu_custom_call.1} parent=1 // pred_fallthru
      _
    // Predicated region
    $region34: #{tpu_custom_call.1} parent=1 // pred_check
      _
    $region35: #{tpu_custom_call.1} parent=1 // pred_check_branch
      %45 = sbr.rel (0) target = $region37
    $region36: #{tpu_custom_call.1} parent=1 // pred_region
      _
    $region37: #{tpu_custom_call.1} parent=1 // pred_fallthru
      _
    // Predicated region
    $region38: #{tpu_custom_call.1} parent=1 // pred_check
      _
    $region39: #{tpu_custom_call.1} parent=1 // pred_check_branch
      %47 = sbr.rel (0) target = $region41
    $region40: #{tpu_custom_call.1} parent=1 // pred_region
      _
    $region41: #{tpu_custom_call.1} parent=1 // pred_fallthru
      _
    // Predicated region
    $region42: #{tpu_custom_call.1} parent=1 // pred_check
      _
    $region43: #{tpu_custom_call.1} parent=1 // pred_check_branch
      %49 = sbr.rel (0) target = $region45
    $region44: #{tpu_custom_call.1} parent=1 // pred_region
      _
    $region45: #{tpu_custom_call.1} parent=1 // pred_fallthru
      _
    // Predicated region
    $region46: #{tpu_custom_call.1} parent=1 // pred_check
      _
    $region47: #{tpu_custom_call.1} parent=1 // pred_check_branch
      %51 = sbr.rel (0) target = $region49
    $region48: #{tpu_custom_call.1} parent=1 // pred_region
      %52 = dma.done [#allocation4], 4096
    $region49: #{tpu_custom_call.1} parent=1 // pred_fallthru
      _
    %p53 = scmp.eq.s32.totalorder 0, 0
    // Predicated region
    $region50: #{tpu_custom_call.1} parent=1 // pred_check
      %p54 = pneg %p53
    $region51: #{tpu_custom_call.1} parent=1 // pred_check_branch
      %56 = sbr.rel (%p54) target = $region53
    $region52: #{tpu_custom_call.1} parent=1 // pred_region
      %vm57 = vcmask 130048
      %58 = vst.msk [vmem:[#allocation2] sm:$0xff] %vm57, 0.0
    $region53: #{tpu_custom_call.1} parent=1 // pred_fallthru
      _
    %v59 = vld [vmem:[#allocation2] sm:$0xff]
    %v60 = vld [vmem:[#allocation3] sm:$0xff]
    %v61 = vld [vmem:[#allocation3 + $0x8] sm:$0xff]
    %v62 = vld [vmem:[#allocation3 + $0x10] sm:$0xff]
    %v63 = vld [vmem:[#allocation3 + $0x18] sm:$0xff]
    %v64 = vld [vmem:[#allocation3 + $0x20] sm:$0xff]
    %v65 = vld [vmem:[#allocation3 + $0x28] sm:$0xff]
    %v66 = vld [vmem:[#allocation3 + $0x30] sm:$0xff]
    %v67 = vld [vmem:[#allocation3 + $0x38] sm:$0xff]
    %v68 = vld [vmem:[#allocation3 + $0x40] sm:$0xff]
    %v69 = vld [vmem:[#allocation3 + $0x48] sm:$0xff]
    %v70 = vld [vmem:[#allocation3 + $0x50] sm:$0xff]
    %v71 = vld [vmem:[#allocation3 + $0x58] sm:$0xff]
    %v72 = vld [vmem:[#allocation3 + $0x60] sm:$0xff]
    %v73 = vld [vmem:[#allocation3 + $0x68] sm:$0xff]
    %v74 = vld [vmem:[#allocation3 + $0x70] sm:$0xff]
    %v75 = vld [vmem:[#allocation3 + $0x78] sm:$0xff]
    %v76 = vld [vmem:[#allocation3 + $0x80] sm:$0xff]
    %v77 = vld [vmem:[#allocation3 + $0x88] sm:$0xff]
    %v78 = vld [vmem:[#allocation3 + $0x90] sm:$0xff]
    %v79 = vld [vmem:[#allocation3 + $0x98] sm:$0xff]
    %v80 = vld [vmem:[#allocation3 + $0xa0] sm:$0xff]
    %v81 = vld [vmem:[#allocation3 + $0xa8] sm:$0xff]
    %v82 = vld [vmem:[#allocation3 + $0xb0] sm:$0xff]
    %v83 = vld [vmem:[#allocation3 + $0xb8] sm:$0xff]
    %v84 = vld [vmem:[#allocation3 + $0xc0] sm:$0xff]
    %v85 = vld [vmem:[#allocation3 + $0xc8] sm:$0xff]
    %v86 = vld [vmem:[#allocation3 + $0xd0] sm:$0xff]
    %v87 = vld [vmem:[#allocation3 + $0xd8] sm:$0xff]
    %v88 = vld [vmem:[#allocation3 + $0xe0] sm:$0xff]
    %v89 = vld [vmem:[#allocation3 + $0xe8] sm:$0xff]
    %v90 = vld [vmem:[#allocation3 + $0xf0] sm:$0xff]
    %v91 = vld [vmem:[#allocation3 + $0xf8] sm:$0xff]
    %v92 = vadd.f32 %v60, %v61
    %93 = vadd.xlane.f32.xlu0 %v92
    %v94 = vpop.xlane.xlu0 %93
    %v95 = vadd.f32 %v62, %v63
    %96 = vadd.xlane.f32.xlu0 %v95
    %v97 = vpop.xlane.xlu0 %96
    %v98 = vadd.f32 %v64, %v65
    %99 = vadd.xlane.f32.xlu0 %v98
    %v100 = vpop.xlane.xlu0 %99
    %v101 = vadd.f32 %v66, %v67
    %102 = vadd.xlane.f32.xlu0 %v101
    %v103 = vpop.xlane.xlu0 %102
    %v104 = vadd.f32 %v68, %v69
    %105 = vadd.xlane.f32.xlu0 %v104
    %v106 = vpop.xlane.xlu0 %105
    %v107 = vadd.f32 %v70, %v71
    %108 = vadd.xlane.f32.xlu0 %v107
    %v109 = vpop.xlane.xlu0 %108
    %v110 = vadd.f32 %v72, %v73
    %111 = vadd.xlane.f32.xlu0 %v110
    %v112 = vpop.xlane.xlu0 %111
    %v113 = vadd.f32 %v74, %v75
    %114 = vadd.xlane.f32.xlu0 %v113
    %v115 = vpop.xlane.xlu0 %114
    %v116 = vadd.f32 %v76, %v77
    %117 = vadd.xlane.f32.xlu0 %v116
    %v118 = vpop.xlane.xlu0 %117
    %v119 = vadd.f32 %v78, %v79
    %120 = vadd.xlane.f32.xlu0 %v119
    %v121 = vpop.xlane.xlu0 %120
    %v122 = vadd.f32 %v80, %v81
    %123 = vadd.xlane.f32.xlu0 %v122
    %v124 = vpop.xlane.xlu0 %123
    %v125 = vadd.f32 %v82, %v83
    %126 = vadd.xlane.f32.xlu0 %v125
    %v127 = vpop.xlane.xlu0 %126
    %v128 = vadd.f32 %v84, %v85
    %129 = vadd.xlane.f32.xlu0 %v128
    %v130 = vpop.xlane.xlu0 %129
    %v131 = vadd.f32 %v86, %v87
    %132 = vadd.xlane.f32.xlu0 %v131
    %v133 = vpop.xlane.xlu0 %132
    %v134 = vadd.f32 %v88, %v89
    %135 = vadd.xlane.f32.xlu0 %v134
    %v136 = vpop.xlane.xlu0 %135
    %v137 = vadd.f32 %v90, %v91
    %138 = vadd.xlane.f32.xlu0 %v137
    %v139 = vpop.xlane.xlu0 %138
    %v156 = vlaneseq
    %v157 = vand.u32 %v156, 127
    %v158 = vlaneseq
    %v159 = vshrl.u32 %v158, 7
    %v160 = vsub.s32 %v157, %v159
    %v161 = vrot.slane %v94, %v160
    %v162 = vadd.s32 %v157, 4294967288
    %v163 = vlaneseq
    %v164 = vshrl.u32 %v163, 7
    %v165 = vsub.s32 %v162, %v164
    %v166 = vrot.slane %v97, %v165
    %vm167 = vcmask 130112
    %v168 = vsel %vm167, %v166, %v161
    %v169 = vlaneseq
    %v170 = vshrl.u32 %v169, 7
    %v171 = vsub.s32 %v157, %v170
    %v172 = vrot.slane %v100, %v171
    %v173 = vlaneseq
    %v174 = vshrl.u32 %v173, 7
    %v175 = vsub.s32 %v162, %v174
    %v176 = vrot.slane %v103, %v175
    %v177 = vsel %vm167, %v176, %v172
    %v178 = vlaneseq
    %v179 = vshrl.u32 %v178, 7
    %v180 = vsub.s32 %v157, %v179
    %v181 = vrot.slane %v106, %v180
    %v182 = vlaneseq
    %v183 = vshrl.u32 %v182, 7
    %v184 = vsub.s32 %v162, %v183
    %v185 = vrot.slane %v109, %v184
    %v186 = vsel %vm167, %v185, %v181
    %v187 = vlaneseq
    %v188 = vshrl.u32 %v187, 7
    %v189 = vsub.s32 %v157, %v188
    %v190 = vrot.slane %v112, %v189
    %v191 = vlaneseq
    %v192 = vshrl.u32 %v191, 7
    %v193 = vsub.s32 %v162, %v192
    %v194 = vrot.slane %v115, %v193
    %v195 = vsel %vm167, %v194, %v190
    %v196 = vlaneseq
    %v197 = vshrl.u32 %v196, 7
    %v198 = vsub.s32 %v157, %v197
    %v199 = vrot.slane %v118, %v198
    %v200 = vlaneseq
    %v201 = vshrl.u32 %v200, 7
    %v202 = vsub.s32 %v162, %v201
    %v203 = vrot.slane %v121, %v202
    %v204 = vsel %vm167, %v203, %v199
    %v205 = vlaneseq
    %v206 = vshrl.u32 %v205, 7
    %v207 = vsub.s32 %v157, %v206
    %v208 = vrot.slane %v124, %v207
    %v209 = vlaneseq
    %v210 = vshrl.u32 %v209, 7
    %v211 = vsub.s32 %v162, %v210
    %v212 = vrot.slane %v127, %v211
    %v213 = vsel %vm167, %v212, %v208
    %v214 = vlaneseq
    %v215 = vshrl.u32 %v214, 7
    %v216 = vsub.s32 %v157, %v215
    %v217 = vrot.slane %v130, %v216
    %v218 = vlaneseq
    %v219 = vshrl.u32 %v218, 7
    %v220 = vsub.s32 %v162, %v219
    %v221 = vrot.slane %v133, %v220
    %v222 = vsel %vm167, %v221, %v217
    %v223 = vlaneseq
    %v224 = vshrl.u32 %v223, 7
    %v225 = vsub.s32 %v157, %v224
    %v226 = vrot.slane %v136, %v225
    %v227 = vlaneseq
    %v228 = vshrl.u32 %v227, 7
    %v229 = vsub.s32 %v162, %v228
    %v230 = vrot.slane %v139, %v229
    %v231 = vsel %vm167, %v230, %v226
    %vm232 = vcmask 1041409
    %v233 = vsel %vm232, %v177, %v168
    %vm234 = vcmask 1042434
    %v235 = vsel %vm234, %v186, %v233
    %vm236 = vcmask 1043459
    %v237 = vsel %vm236, %v195, %v235
    %vm238 = vcmask 1044484
    %v239 = vsel %vm238, %v204, %v237
    %vm240 = vcmask 1045509
    %v241 = vsel %vm240, %v213, %v239
    %vm242 = vcmask 1046534
    %v243 = vsel %vm242, %v222, %v241
    %vm244 = vcmask 1047559
    %v245 = vsel %vm244, %v231, %v243
    %v247 = vadd.f32 %v59, %v245
    %vm248 = vcmask 130048
    %249 = vst.msk [vmem:[#allocation2] sm:$0xff] %vm248, %v247
    // Predicated region
    $region54: #{tpu_custom_call.1} parent=1 // pred_check
      %p250 = pneg %p53
    $region55: #{tpu_custom_call.1} parent=1 // pred_check_branch
      %252 = sbr.rel (%p250) target = $region57
    $region56: #{tpu_custom_call.1} parent=1 // pred_region
      %v253 = vld [vmem:[#allocation2] sm:$0xff]
      %v254 = vmul.f32 %v253, 0.00390625
      %v255 = vld [vmem:[%s1] sm:$0x1]
      %v256 = vld [vmem:[%s2] sm:$0x1]
      %v257 = vsel %vm248, %v254, 0.0
      %258 = vadd.xlane.f32.xlu0 %v257
      %v259 = vpop.xlane.xlu0 %258
      %v260 = vrcp.pop 16.0
      %v261 = vmul.f32 %v259, %v260
      %v262 = vsub.f32 %v254, %v261
      %v263 = vmul.f32 %v262, %v262
      %v264 = vsel %vm248, %v263, 0.0
      %265 = vadd.xlane.f32.xlu0 %v264
      %v266 = vpop.xlane.xlu0 %265
      %v267 = vmul.f32 %v266, %v260
      %v268 = vadd.f32 %v267, 1e-05
      %v269 = vrsqrt.pop %v268
      %v270 = vmul.f32 %v262, %v269
      %v272 = vlaneseq
      %v273 = vshrl.u32 %v272, 7
      %v274 = vsub.s32 0, %v273
      %v275 = vrot.slane %v255, %v274
      %v277 = vmul.f32 %v270, %v275
      %v279 = vlaneseq
      %v280 = vshrl.u32 %v279, 7
      %v281 = vsub.s32 0, %v280
      %v282 = vrot.slane %v256, %v281
      %v284 = vadd.f32 %v277, %v282
      %v285 = vld [vmem:[%s3] sm:$0xff]
      %v286 = vld [vmem:[%s3 + $0x8] sm:$0xff]
      %v287 = vld [vmem:[%s4] sm:$0x1]
      %v289 = vlaneseq
      %v290 = vshrl.u32 %v289, 7
      %v291 = vsub.s32 0, %v290
      %v292 = vrot.slane %v287, %v291
      %v295 = vsel %vm248, %v284, 0
      %297 = vmatprep.subr.mxu0 0.0
      %298 = vmatpush1.msra.mxu0 0.0
      %299 = vmatprep.subr.mxu0 0.0
      %300 = vmatpush1.msra.mxu0 0.0
      %301 = vmatprep.subr.mxu0 0.0
      %302 = vmatpush1.msra.mxu0 0.0
      %303 = vmatprep.subr.mxu0 0.0
      %304 = vmatpush1.msra.mxu0 0.0
      %305 = vmatprep.subr.mxu0 0.0
      %306 = vmatpush1.msra.mxu0 0.0
      %307 = vmatprep.subr.mxu0 0.0
      %308 = vmatpush1.msra.mxu0 0.0
      %309 = vmatprep.subr.mxu0 0.0
      %310 = vmatpush1.msra.mxu0 0.0
      %311 = vmatprep.subr.mxu0 0.0
      %312 = vmatpush1.msra.mxu0 0.0
      %313 = vmatprep.subr.mxu0 0.0
      %314 = vmatpush1.msra.mxu0 0.0
      %315 = vmatprep.subr.mxu0 0.0
      %316 = vmatpush1.msra.mxu0 0.0
      %317 = vmatprep.subr.mxu0 0.0
      %318 = vmatpush1.msra.mxu0 0.0
      %319 = vmatprep.subr.mxu0 0.0
      %320 = vmatpush1.msra.mxu0 0.0
      %321 = vmatprep.subr.mxu0 0.0
      %322 = vmatpush1.msra.mxu0 0.0
      %323 = vmatprep.subr.mxu0 0.0
      %324 = vmatpush1.msra.mxu0 0.0
      %325 = vmatprep.subr.mxu0 0.0
      %326 = vmatpush1.msra.mxu0 %v286
      %327 = vmatprep.subr.mxu0 0.0
      %328 = vmatpush1.msra.mxu0 %v285
      %329 = vmatprep.subr.mxu0 0.0
      %330 = vmatpush2.msra.mxu0 0.0
      %331 = vmatprep.subr.mxu0 0.0
      %332 = vmatpush2.msra.mxu0 0.0
      %333 = vmatprep.subr.mxu0 0.0
      %334 = vmatpush2.msra.mxu0 0.0
      %335 = vmatprep.subr.mxu0 0.0
      %336 = vmatpush2.msra.mxu0 0.0
      %337 = vmatprep.subr.mxu0 0.0
      %338 = vmatpush2.msra.mxu0 0.0
      %339 = vmatprep.subr.mxu0 0.0
      %340 = vmatpush2.msra.mxu0 0.0
      %341 = vmatprep.subr.mxu0 0.0
      %342 = vmatpush2.msra.mxu0 0.0
      %343 = vmatprep.subr.mxu0 0.0
      %344 = vmatpush2.msra.mxu0 0.0
      %345 = vmatprep.subr.mxu0 0.0
      %346 = vmatpush2.msra.mxu0 0.0
      %347 = vmatprep.subr.mxu0 0.0
      %348 = vmatpush2.msra.mxu0 0.0
      %349 = vmatprep.subr.mxu0 0.0
      %350 = vmatpush2.msra.mxu0 0.0
      %351 = vmatprep.subr.mxu0 0.0
      %352 = vmatpush2.msra.mxu0 0.0
      %353 = vmatprep.subr.mxu0 0.0
      %354 = vmatpush2.msra.mxu0 0.0
      %355 = vmatprep.subr.mxu0 0.0
      %356 = vmatpush2.msra.mxu0 0.0
      %357 = vmatprep.subr.mxu0 0.0
      %358 = vmatpush2.msra.mxu0 0.0
      %359 = vmatprep.subr.mxu0 0.0
      %360 = vmatpush2.msra.mxu0 0.0
      %361 = vmatprep.mubr.f32.mxu0 0.0
      %362 = vmatmul.mubr.f32.gmra.mxu0 %v295
      %v363 = vpop.f32.mrf.mxu0
      %v364 = vadd.f32 %v292, %v363
      %v365 = vpop.f32.mrf.mxu0
      %366 = vdwg.mxu0
      %v367 = vld [vmem:[%s5] sm:$0x1]
      %v368 = vld [vmem:[%s6] sm:$0x1]
      %vm369 = vcmask 523264
      %v370 = vsel %vm369, %v364, 0.0
      %371 = vadd.xlane.f32.xlu0 %v370
      %v372 = vpop.xlane.xlu0 %371
      %v373 = vrcp.pop 64.0
      %v374 = vmul.f32 %v372, %v373
      %v375 = vsub.f32 %v364, %v374
      %v376 = vmul.f32 %v375, %v375
      %v377 = vsel %vm369, %v376, 0.0
      %378 = vadd.xlane.f32.xlu0 %v377
      %v379 = vpop.xlane.xlu0 %378
      %v380 = vmul.f32 %v379, %v373
      %v381 = vadd.f32 %v380, 1e-05
      %v382 = vrsqrt.pop %v381
      %v383 = vmul.f32 %v375, %v382
      %v385 = vlaneseq
      %v386 = vshrl.u32 %v385, 7
      %v387 = vsub.s32 0, %v386
      %v388 = vrot.slane %v367, %v387
      %v390 = vmul.f32 %v383, %v388
      %v392 = vlaneseq
      %v393 = vshrl.u32 %v392, 7
      %v394 = vsub.s32 0, %v393
      %v395 = vrot.slane %v368, %v394
      %v397 = vadd.f32 %v390, %v395
      %v398 = vmax.f32 %v397, 0.0
      %v399 = vld [vmem:[%s7] sm:$0xff]
      %v400 = vld [vmem:[%s7 + $0x8] sm:$0xff]
      %v401 = vld [vmem:[%s7 + $0x10] sm:$0xff]
      %v402 = vld [vmem:[%s7 + $0x18] sm:$0xff]
      %v403 = vld [vmem:[%s7 + $0x20] sm:$0xff]
      %v404 = vld [vmem:[%s7 + $0x28] sm:$0xff]
      %v405 = vld [vmem:[%s7 + $0x30] sm:$0xff]
      %v406 = vld [vmem:[%s7 + $0x38] sm:$0xff]
      %v407 = vld [vmem:[%s8] sm:$0x1]
      %v409 = vlaneseq
      %v410 = vshrl.u32 %v409, 7
      %v411 = vsub.s32 0, %v410
      %v412 = vrot.slane %v407, %v411
      %v415 = vsel %vm369, %v398, 0
      %417 = vmatprep.subr.mxu0 0.0
      %418 = vmatpush1.msra.mxu0 0.0
      %419 = vmatprep.subr.mxu0 0.0
      %420 = vmatpush1.msra.mxu0 0.0
      %421 = vmatprep.subr.mxu0 0.0
      %422 = vmatpush1.msra.mxu0 0.0
      %423 = vmatprep.subr.mxu0 0.0
      %424 = vmatpush1.msra.mxu0 0.0
      %425 = vmatprep.subr.mxu0 0.0
      %426 = vmatpush1.msra.mxu0 0.0
      %427 = vmatprep.subr.mxu0 0.0
      %428 = vmatpush1.msra.mxu0 0.0
      %429 = vmatprep.subr.mxu0 0.0
      %430 = vmatpush1.msra.mxu0 0.0
      %431 = vmatprep.subr.mxu0 0.0
      %432 = vmatpush1.msra.mxu0 0.0
      %433 = vmatprep.subr.mxu0 0.0
      %434 = vmatpush1.msra.mxu0 %v406
      %435 = vmatprep.subr.mxu0 0.0
      %436 = vmatpush1.msra.mxu0 %v405
      %437 = vmatprep.subr.mxu0 0.0
      %438 = vmatpush1.msra.mxu0 %v404
      %439 = vmatprep.subr.mxu0 0.0
      %440 = vmatpush1.msra.mxu0 %v403
      %441 = vmatprep.subr.mxu0 0.0
      %442 = vmatpush1.msra.mxu0 %v402
      %443 = vmatprep.subr.mxu0 0.0
      %444 = vmatpush1.msra.mxu0 %v401
      %445 = vmatprep.subr.mxu0 0.0
      %446 = vmatpush1.msra.mxu0 %v400
      %447 = vmatprep.subr.mxu0 0.0
      %448 = vmatpush1.msra.mxu0 %v399
      %449 = vmatprep.subr.mxu0 0.0
      %450 = vmatpush2.msra.mxu0 0.0
      %451 = vmatprep.subr.mxu0 0.0
      %452 = vmatpush2.msra.mxu0 0.0
      %453 = vmatprep.subr.mxu0 0.0
      %454 = vmatpush2.msra.mxu0 0.0
      %455 = vmatprep.subr.mxu0 0.0
      %456 = vmatpush2.msra.mxu0 0.0
      %457 = vmatprep.subr.mxu0 0.0
      %458 = vmatpush2.msra.mxu0 0.0
      %459 = vmatprep.subr.mxu0 0.0
      %460 = vmatpush2.msra.mxu0 0.0
      %461 = vmatprep.subr.mxu0 0.0
      %462 = vmatpush2.msra.mxu0 0.0
      %463 = vmatprep.subr.mxu0 0.0
      %464 = vmatpush2.msra.mxu0 0.0
      %465 = vmatprep.subr.mxu0 0.0
      %466 = vmatpush2.msra.mxu0 0.0
      %467 = vmatprep.subr.mxu0 0.0
      %468 = vmatpush2.msra.mxu0 0.0
      %469 = vmatprep.subr.mxu0 0.0
      %470 = vmatpush2.msra.mxu0 0.0
      %471 = vmatprep.subr.mxu0 0.0
      %472 = vmatpush2.msra.mxu0 0.0
      %473 = vmatprep.subr.mxu0 0.0
      %474 = vmatpush2.msra.mxu0 0.0
      %475 = vmatprep.subr.mxu0 0.0
      %476 = vmatpush2.msra.mxu0 0.0
      %477 = vmatprep.subr.mxu0 0.0
      %478 = vmatpush2.msra.mxu0 0.0
      %479 = vmatprep.subr.mxu0 0.0
      %480 = vmatpush2.msra.mxu0 0.0
      %481 = vmatprep.mubr.f32.mxu0 0.0
      %482 = vmatmul.mubr.f32.gmra.mxu0 %v415
      %v483 = vpop.f32.mrf.mxu0
      %v484 = vadd.f32 %v412, %v483
      %v485 = vpop.f32.mrf.mxu0
      %486 = vdwg.mxu0
      %v487 = vld [vmem:[%s9] sm:$0x1]
      %v488 = vld [vmem:[%s10] sm:$0x1]
      %vm489 = vcmask 261120
      %v490 = vsel %vm489, %v484, 0.0
      %491 = vadd.xlane.f32.xlu0 %v490
      %v492 = vpop.xlane.xlu0 %491
      %v493 = vrcp.pop 32.0
      %v494 = vmul.f32 %v492, %v493
      %v495 = vsub.f32 %v484, %v494
      %v496 = vmul.f32 %v495, %v495
      %v497 = vsel %vm489, %v496, 0.0
      %498 = vadd.xlane.f32.xlu0 %v497
      %v499 = vpop.xlane.xlu0 %498
      %v500 = vmul.f32 %v499, %v493
      %v501 = vadd.f32 %v500, 1e-05
      %v502 = vrsqrt.pop %v501
      %v503 = vmul.f32 %v495, %v502
      %v505 = vlaneseq
      %v506 = vshrl.u32 %v505, 7
      %v507 = vsub.s32 0, %v506
      %v508 = vrot.slane %v487, %v507
      %v510 = vmul.f32 %v503, %v508
      %v512 = vlaneseq
      %v513 = vshrl.u32 %v512, 7
      %v514 = vsub.s32 0, %v513
      %v515 = vrot.slane %v488, %v514
      %v517 = vadd.f32 %v510, %v515
      %v518 = vmax.f32 %v517, 0.0
      %519 = vst.msk [vmem:[#allocation6] sm:$0xff] %vm489, %v518
    $region57: #{tpu_custom_call.1} parent=1 // pred_fallthru
      _
    // Predicated region
    $region58: #{tpu_custom_call.1} parent=1 // pred_check
      _
    $region59: #{tpu_custom_call.1} parent=1 // pred_check_branch
      %521 = sbr.rel (0) target = $region61
    $region60: #{tpu_custom_call.1} parent=1 // pred_region
      %s523 = ssub.s32 128, 128
      %524 = vsyncadd [#allocation5], %s523
      %s526 = sshll.u32 [#allocation6], 4
      %s527 = int_to_ptr.vmem [resolvable:$true] %s526
      %529 = dma.vmem_to_hbm [thread:$0]  %s527, 128, %s11, [#allocation5]
    $region61: #{tpu_custom_call.1} parent=1 // pred_fallthru
      _
    // Predicated region
    $region62: #{tpu_custom_call.1} parent=1 // pred_check
      _
    $region63: #{tpu_custom_call.1} parent=1 // pred_check_branch
      %531 = sbr.rel (0) target = $region65
    $region64: #{tpu_custom_call.1} parent=1 // pred_region
      %532 = dma.done [#allocation5], 128
    $region65: #{tpu_custom_call.1} parent=1 // pred_fallthru
      _
    %533 = vsyncpa [#allocation4], 1
    %534 = vsyncpa [#allocation5], 1

</llo_original>
